<compile_context>
chip_gen: v5e
topology: v5e:2x2
jax: 0.10.0
libtpu: 0.0.40
codegen_flags: <defaults>
</compile_context>

<pallas_src>
import functools

import jax
import jax.numpy as jnp
from jax.experimental import pallas as pl
from jax.experimental.pallas import tpu as pltpu


# ---------------------------------------------------------------------------
# Kernels
# ---------------------------------------------------------------------------

def _rbn_fused_kernel(params_ref, x_ref, gamma_ref, o_ref, *, n_rows, bf16_affine):
    # params_ref: (2,) f32 in SMEM -> [epsilon, beta]
    # x_ref: (N, C) block, gamma_ref: (1, C) block, o_ref: (N, C) block
    eps = params_ref[0]
    beta = params_ref[1]

    x = x_ref[...]
    xf = x.astype(jnp.float32)

    # Single pass over the block: sum and sum-of-squares (f32 accumulation).
    s = jnp.sum(xf, axis=0, keepdims=True)             # (1, C)
    ss = jnp.sum(xf * xf, axis=0, keepdims=True)       # (1, C)

    m = s * jnp.float32(1.0 / n_rows)                  # mean
    # Unbiased variance (torch.var default): (sum x^2 - N*m^2) / (N - 1)
    var = (ss - s * m) * jnp.float32(1.0 / (n_rows - 1))
    var = jnp.maximum(var, 0.0)                        # cancellation guard
    inv_v = jax.lax.rsqrt(var + eps)                   # 1 / sqrt(var + eps)

    # Fold normalization + affine into a per-column scale/shift:
    #   out = (x - m) * inv_v * gamma + beta = x * scale + shift
    scale = gamma_ref[...].astype(jnp.float32) * inv_v
    shift = beta - m * scale

    if bf16_affine:
        # v6e/v7x only: bf16 VPU keeps the streaming elementwise path cheap.
        out = x * scale.astype(x.dtype) + shift.astype(x.dtype)
    else:
        out = xf * scale + shift
    o_ref[...] = out.astype(o_ref.dtype)


def _rbn_stats_kernel(params_ref, x_ref, gamma_ref, scale_ref, shift_ref,
                      sum_acc, ss_acc, *, n_rows, n_block):
    # Grid: (feature blocks [parallel], row blocks [arbitrary, innermost]).
    i = pl.program_id(1)

    @pl.when(i == 0)
    def _():
        sum_acc[...] = jnp.zeros_like(sum_acc)
        ss_acc[...] = jnp.zeros_like(ss_acc)

    xf = x_ref[...].astype(jnp.float32)
    # Mask rows past n_rows (last row block may be partial -> garbage reads).
    row_ids = i * n_block + jax.lax.broadcasted_iota(jnp.int32, xf.shape, 0)
    xf = jnp.where(row_ids < n_rows, xf, jnp.float32(0.0))

    sum_acc[...] += jnp.sum(xf, axis=0, keepdims=True)
    ss_acc[...] += jnp.sum(xf * xf, axis=0, keepdims=True)

    @pl.when(i == pl.num_programs(1) - 1)
    def _():
        eps = params_ref[0]
        beta = params_ref[1]
        s = sum_acc[...]
        m = s * jnp.float32(1.0 / n_rows)
        var = (ss_acc[...] - s * m) * jnp.float32(1.0 / (n_rows - 1))
        var = jnp.maximum(var, 0.0)
        inv_v = jax.lax.rsqrt(var + eps)
        scale = gamma_ref[...].astype(jnp.float32) * inv_v
        scale_ref[...] = scale
        shift_ref[...] = beta - m * scale


def _rbn_affine_kernel(x_ref, scale_ref, shift_ref, o_ref, *, bf16_affine):
    x = x_ref[...]
    if bf16_affine:
        out = x * scale_ref[...].astype(x.dtype) + shift_ref[...].astype(x.dtype)
    else:
        out = x.astype(jnp.float32) * scale_ref[...] + shift_ref[...]
    o_ref[...] = out.astype(o_ref.dtype)


# ---------------------------------------------------------------------------
# Sizing helpers
# ---------------------------------------------------------------------------

def _round_down_128(v):
    return (v // 128) * 128


def _round_up_128(v):
    return ((v + 127) // 128) * 128


def _round_down_8(v):
    return (v // 8) * 8


def _round_up_8(v):
    return ((v + 7) // 8) * 8


def _device_kind():
    try:
        return jax.devices()[0].device_kind.lower()
    except Exception:
        return ""


def _vmem_capacity_bytes(kind):
    """Per-TensorCore VMEM capacity; device_kind-derived fallback."""
    try:
        info = pltpu.get_tpu_info()
        cap = getattr(info, "vmem_capacity_bytes", None)
        if cap:
            return int(cap)
    except Exception:
        pass
    if "v7" in kind or "7x" in kind:
        return 64 * 1024 * 1024      # v7x: 64 MiB / TC
    return 128 * 1024 * 1024         # v5e / v6e: 128 MiB


def _has_bf16_vpu(kind):
    # v6e / v7x VPUs have native bf16 ALUs; v5e and older do not.
    return any(t in kind for t in ("v6", "v7", "7x"))


def _choose_d_block(n, d, in_itemsize, out_itemsize, vmem_budget, *,
                    target_step_bytes=4 << 20, min_step_bytes=1 << 20,
                    min_steps=8):
    """Feature-tile width for the fused (whole-batch resident) kernel.

    Policy for an HBM-bound kernel:
      * per-step HBM traffic roughly in [1 MiB, 4 MiB]
      * at least ~min_steps grid steps when D allows it (>= 4/TC on v7x)
      * double-buffered in/out + f32 temps fit the VMEM budget
      * multiple of 128 columns (lane-dense stores)
    """
    if d <= 128:
        return d
    step_row_bytes = n * (in_itemsize + out_itemsize)              # HBM bytes / column
    ws_col_bytes = n * (2 * in_itemsize + 2 * out_itemsize + 8)    # VMEM bytes / column

    cap_cols = max(128, _round_down_128(vmem_budget // max(ws_col_bytes, 1)))
    tgt_cols = max(128, _round_down_128(target_step_bytes // max(step_row_bytes, 1)))
    upper = min(cap_cols, tgt_cols)

    lower = max(128, _round_down_128(min_step_bytes // max(step_row_bytes, 1)))
    want = max(128, _round_down_128(pl.cdiv(d, min_steps)))

    d_block = min(upper, max(lower, want))
    d_block = max(128, min(d_block, _round_up_128(d)))
    return d_block


def _choose_2d_blocks(n, d, in_itemsize, out_itemsize, vmem_budget, *,
                      target_step_bytes=2 << 20):
    """(row block, feature block) for the two-level (batch-tiled) path."""
    if d <= 128:
        d_block = d
    else:
        d_block = max(128, min(512, _round_down_128(d)))
    row_bytes = max(d_block * in_itemsize, 1)
    n_block = max(8, _round_down_8(target_step_bytes // row_bytes))
    n_block = min(n_block, _round_up_8(n))
    while (n_block > 8 and
           n_block * d_block * (2 * in_itemsize + 2 * out_itemsize + 8) > vmem_budget):
        n_block = max(8, _round_down_8(n_block // 2))
    return n_block, d_block


# ---------------------------------------------------------------------------
# pallas_call wrappers
# ---------------------------------------------------------------------------

def _fused_call(params, x, gamma, *, d_block, deep_buffer, vmem_limit, bf16_affine):
    N, D = x.shape
    num_steps = pl.cdiv(D, d_block)
    in_b = jnp.dtype(x.dtype).itemsize

    if deep_buffer:
        x_spec = pl.BlockSpec((N, d_block), lambda j: (0, j),
                              pipeline_mode=pl.Buffered(3))
    else:
        x_spec = pl.BlockSpec((N, d_block), lambda j: (0, j))

    cost = pl.CostEstimate(
        flops=7 * N * D,
        transcendentals=D,
        bytes_accessed=N * D * 2 * in_b + D * jnp.dtype(gamma.dtype).itemsize,
    )

    kernel = functools.partial(_rbn_fused_kernel, n_rows=N, bf16_affine=bf16_affine)
    return pl.pallas_call(
        kernel,
        out_shape=jax.ShapeDtypeStruct((N, D), x.dtype),
        grid_spec=pltpu.PrefetchScalarGridSpec(
            num_scalar_prefetch=0,
            grid=(num_steps,),
            in_specs=[
                pl.BlockSpec(memory_space=pltpu.MemorySpace.SMEM),   # [eps, beta]
                x_spec,                                              # x
                pl.BlockSpec((1, d_block), lambda j: (0, j)),        # gamma
            ],
            out_specs=pl.BlockSpec((N, d_block), lambda j: (0, j)),
        ),
        compiler_params=pltpu.CompilerParams(
            dimension_semantics=("parallel",),
            vmem_limit_bytes=vmem_limit,
        ),
        cost_estimate=cost,
    )(params, x, gamma)


def _stats_pass(params, x, gamma, *, n_block, d_block, vmem_limit):
    N, D = x.shape
    grid = (pl.cdiv(D, d_block), pl.cdiv(N, n_block))
    in_b = jnp.dtype(x.dtype).itemsize

    cost = pl.CostEstimate(
        flops=4 * N * D,
        transcendentals=D,
        bytes_accessed=N * D * in_b + 2 * D * 4 + D * jnp.dtype(gamma.dtype).itemsize,
    )

    kernel = functools.partial(_rbn_stats_kernel, n_rows=N, n_block=n_block)
    return pl.pallas_call(
        kernel,
        out_shape=(jax.ShapeDtypeStruct((1, D), jnp.float32),
                   jax.ShapeDtypeStruct((1, D), jnp.float32)),
        grid_spec=pltpu.PrefetchScalarGridSpec(
            num_scalar_prefetch=0,
            grid=grid,
            in_specs=[
                pl.BlockSpec(memory_space=pltpu.MemorySpace.SMEM),           # [eps, beta]
                pl.BlockSpec((n_block, d_block), lambda j, i: (i, j)),       # x
                pl.BlockSpec((1, d_block), lambda j, i: (0, j)),             # gamma
            ],
            out_specs=[
                pl.BlockSpec((1, d_block), lambda j, i: (0, j)),             # scale
                pl.BlockSpec((1, d_block), lambda j, i: (0, j)),             # shift
            ],
            scratch_shapes=[pltpu.VMEM((1, d_block), jnp.float32),
                            pltpu.VMEM((1, d_block), jnp.float32)],
        ),
        compiler_params=pltpu.CompilerParams(
            dimension_semantics=("parallel", "arbitrary"),
            vmem_limit_bytes=vmem_limit,
        ),
        cost_estimate=cost,
    )(params, x, gamma)


def _affine_pass(x, scale, shift, *, n_block, d_block, vmem_limit, bf16_affine):
    N, D = x.shape
    grid = (pl.cdiv(D, d_block), pl.cdiv(N, n_block))
    in_b = jnp.dtype(x.dtype).itemsize

    cost = pl.CostEstimate(
        flops=2 * N * D,
        transcendentals=0,
        bytes_accessed=N * D * 2 * in_b + 2 * D * 4,
    )

    kernel = functools.partial(_rbn_affine_kernel, bf16_affine=bf16_affine)
    return pl.pallas_call(
        kernel,
        out_shape=jax.ShapeDtypeStruct((N, D), x.dtype),
        grid_spec=pltpu.PrefetchScalarGridSpec(
            num_scalar_prefetch=0,
            grid=grid,
            in_specs=[
                pl.BlockSpec((n_block, d_block), lambda j, i: (i, j)),       # x
                pl.BlockSpec((1, d_block), lambda j, i: (0, j)),             # scale
                pl.BlockSpec((1, d_block), lambda j, i: (0, j)),             # shift
            ],
            out_specs=pl.BlockSpec((n_block, d_block), lambda j, i: (i, j)),
        ),
        compiler_params=pltpu.CompilerParams(
            dimension_semantics=("parallel", "parallel"),
            vmem_limit_bytes=vmem_limit,
        ),
        cost_estimate=cost,
    )(x, scale, shift)


# ---------------------------------------------------------------------------
# Public entry point
# ---------------------------------------------------------------------------

def regularized_batch_norm(x, gamma, *, epsilon=0.001, beta=0.0, d_block=None,
                           force_two_level=False):
    """x: (N, D_in) float array; gamma: (1, D_in). Returns (N, D_in)."""
    N, D = x.shape
    assert gamma.shape == (1, D)
    assert N >= 2, "unbiased variance (N-1 denominator) requires N >= 2"

    kind = _device_kind()
    vmem_cap = _vmem_capacity_bytes(kind)
    # Raise the scoped VMEM limit above the 16/32 MiB default, with headroom.
    vmem_limit = min(int(0.75 * vmem_cap), 100 * 1024 * 1024)
    budget = int(0.6 * vmem_limit)           # compiler scratch headroom

    in_b = jnp.dtype(x.dtype).itemsize
    out_b = in_b
    bf16_affine = (x.dtype == jnp.bfloat16) and _has_bf16_vpu(kind)

    # NOTE: batch size N is baked into the kernel (recompiles per batch size).
    params = jnp.array([epsilon, beta], dtype=jnp.float32)

    # Two-level path when even a 128-column, whole-batch block would not fit VMEM.
    floor_cols = min(128, D)
    fused_floor_bytes = N * floor_cols * (2 * in_b + 2 * out_b + 8)
    use_two_level = force_two_level or (fused_floor_bytes > budget)

    if use_two_level:
        n_blk, d_blk = _choose_2d_blocks(N, D, in_b, out_b, budget)
        scale, shift = _stats_pass(params, x, gamma,
                                   n_block=n_blk, d_block=d_blk,
                                   vmem_limit=vmem_limit)
        return _affine_pass(x, scale, shift,
                            n_block=n_blk, d_block=d_blk,
                            vmem_limit=vmem_limit, bf16_affine=bf16_affine)

    if d_block is None:
        d_block = _choose_d_block(N, D, in_b, out_b, budget)
    else:
        assert d_block % 128 == 0 or d_block == D, (
            "d_block must be a multiple of 128 (lane-dense stores) or the full "
            "feature dimension")

    num_steps = pl.cdiv(D, d_block)
    deep_buffer = (d_block == 128 and num_steps >= 8 and
                   N * d_block * (3 * in_b + 2 * out_b + 8) <= budget)

    return _fused_call(params, x, gamma, d_block=d_block,
                       deep_buffer=deep_buffer, vmem_limit=vmem_limit,
                       bf16_affine=bf16_affine)


# ---------------------------------------------------------------------------
# Reference + self-test
# ---------------------------------------------------------------------------

def _reference(x, gamma, epsilon=0.001, beta=0.0):
    m = jnp.mean(x, axis=0, keepdims=True)
    var = jnp.var(x, axis=0, keepdims=True, ddof=1)   # unbiased, like torch.var
    v = jnp.sqrt(var + epsilon)
    return (x - m) / v * gamma + beta


if __name__ == "__main__":
    key = jax.random.PRNGKey(0)
    k1, k2, k3, k4 = jax.random.split(key, 4)

    # Deterministic parameter init (the module draws gamma ~ U(0.95, 1.05); fix it).
    gamma_val = 0.975
    epsilon = 0.001
    beta = 0.0

    def check(x, gamma, *, atol, rtol, **kw):
        out = jax.block_until_ready(
            regularized_batch_norm(x, gamma, epsilon=epsilon, beta=beta, **kw))
        ref = _reference(x.astype(jnp.float32), gamma.astype(jnp.float32),
                         epsilon, beta)
        assert out.shape == x.shape
        assert jnp.allclose(out.astype(jnp.float32), ref, atol=atol, rtol=rtol), \
            "mismatch vs reference"

    # 1) Module-sized case (batch=8, D_in=32): single full-extent block.
    x1 = jax.random.normal(k1, (8, 32), dtype=jnp.float32)
    g1 = jnp.full((1, 32), gamma_val, dtype=jnp.float32)
    check(x1, g1, atol=2e-5, rtol=2e-5)

    # 2) Tiled fused path: many 128-wide feature steps, deep input buffering.
    x2 = jax.random.normal(k2, (1024, 1536), dtype=jnp.float32)
    g2 = jnp.full((1, 1536), gamma_val, dtype=jnp.float32)
    check(x2, g2, atol=1e-4, rtol=1e-4)

    # 3) Two-level (batch-tiled) reduction path with ragged N and D.
    x3 = jax.random.normal(k3, (300, 320), dtype=jnp.float32) * 2.0 + 3.0
    g3 = jnp.full((1, 320), gamma_val, dtype=jnp.float32)
    check(x3, g3, atol=1e-4, rtol=1e-4, force_two_level=True)

    # 4) bf16 inputs (generation-gated affine math).
    x4 = jax.random.normal(k4, (64, 256), dtype=jnp.bfloat16)
    g4 = jnp.full((1, 256), gamma_val, dtype=jnp.float32)
    check(x4, g4, atol=5e-2, rtol=5e-2)

    print("KERNEL_OK")
</pallas_src>

<mosaic_0001>
module attributes {stable_mosaic.version = 11 : i64} {
  func.func @_rbn_fused_kernel(%arg0: i32, %arg1: memref<2xf32, #tpu.memory_space<smem>>, %arg2: memref<8x32xf32, #tpu.memory_space<vmem>>, %arg3: memref<1x32xf32, #tpu.memory_space<vmem>>, %arg4: memref<8x32xf32, #tpu.memory_space<vmem>>) attributes {dimension_semantics = [#tpu.dimension_semantics<parallel>], iteration_bounds = array<i64: 1>, scalar_prefetch = 0 : i64, scratch_operands = 0 : i64, tpu.core_type = #tpu.core_type<tc>, window_params = [{transform_indices = @transform_0, window_bounds = array<i64: 2>}, {transform_indices = @transform_1, window_bounds = array<i64: 8, 32>}, {transform_indices = @transform_2, window_bounds = array<i64: 1, 32>}, {transform_indices = @transform_3, window_bounds = array<i64: 8, 32>}]} {
    %c0 = arith.constant 0 : index
    %0 = memref.load %arg1[%c0] : memref<2xf32, #tpu.memory_space<smem>>
    %c1 = arith.constant 1 : index
    %1 = memref.load %arg1[%c1] : memref<2xf32, #tpu.memory_space<smem>>
    %c0_0 = arith.constant 0 : index
    %c0_1 = arith.constant 0 : index
    %2 = vector.load %arg2[%c0_0, %c0_1] : memref<8x32xf32, #tpu.memory_space<vmem>>, vector<8x32xf32>
    %cst = arith.constant dense<0.000000e+00> : vector<32xf32>
    %3 = vector.multi_reduction <add>, %2, %cst [0] : vector<8x32xf32> to vector<32xf32>
    %4 = vector.shape_cast %3 : vector<32xf32> to vector<1x32xf32>
    %5 = arith.mulf %2, %2 : vector<8x32xf32>
    %cst_2 = arith.constant dense<0.000000e+00> : vector<32xf32>
    %6 = vector.multi_reduction <add>, %5, %cst_2 [0] : vector<8x32xf32> to vector<32xf32>
    %7 = vector.shape_cast %6 : vector<32xf32> to vector<1x32xf32>
    %cst_3 = arith.constant 1.250000e-01 : f32
    %8 = vector.broadcast %cst_3 : f32 to vector<1x32xf32>
    %9 = arith.mulf %4, %8 : vector<1x32xf32>
    %10 = arith.mulf %4, %9 : vector<1x32xf32>
    %11 = arith.subf %7, %10 : vector<1x32xf32>
    %cst_4 = arith.constant 0.142857149 : f32
    %12 = vector.broadcast %cst_4 : f32 to vector<1x32xf32>
    %13 = arith.mulf %11, %12 : vector<1x32xf32>
    %cst_5 = arith.constant 0.000000e+00 : f32
    %14 = vector.broadcast %cst_5 : f32 to vector<1x32xf32>
    %15 = arith.maximumf %13, %14 : vector<1x32xf32>
    %16 = vector.broadcast %0 : f32 to vector<1x32xf32>
    %17 = arith.addf %15, %16 : vector<1x32xf32>
    %18 = math.rsqrt %17 : vector<1x32xf32>
    %c0_6 = arith.constant 0 : index
    %c0_7 = arith.constant 0 : index
    %19 = vector.load %arg3[%c0_6, %c0_7] : memref<1x32xf32, #tpu.memory_space<vmem>>, vector<1x32xf32>
    %20 = arith.mulf %19, %18 : vector<1x32xf32>
    %21 = arith.mulf %9, %20 : vector<1x32xf32>
    %22 = vector.broadcast %1 : f32 to vector<1x32xf32>
    %23 = arith.subf %22, %21 : vector<1x32xf32>
    %24 = vector.broadcast %20 : vector<1x32xf32> to vector<8x32xf32>
    %25 = arith.mulf %2, %24 : vector<8x32xf32>
    %26 = vector.broadcast %23 : vector<1x32xf32> to vector<8x32xf32>
    %27 = arith.addf %25, %26 : vector<8x32xf32>
    %c0_8 = arith.constant 0 : index
    %c0_9 = arith.constant 0 : index
    %28 = vector.load %arg4[%c0_8, %c0_9] : memref<8x32xf32, #tpu.memory_space<vmem>>, vector<8x32xf32>
    tpu.vector_store %arg4[%c0_8, %c0_9], %27 {strides = array<i32>} : memref<8x32xf32, #tpu.memory_space<vmem>>, vector<8x32xf32>,
    return
  }
  func.func @transform_0(%arg0: i32) -> i32 {
    %c0_i32 = arith.constant 0 : i32
    %c0_i32_0 = arith.constant 0 : i32
    return %c0_i32 : i32
  }
  func.func @transform_1(%arg0: i32) -> (i32, i32) {
    %c0_i32 = arith.constant 0 : i32
    %c0_i32_0 = arith.constant 0 : i32
    return %c0_i32, %arg0 : i32, i32
  }
  func.func @transform_2(%arg0: i32) -> (i32, i32) {
    %c0_i32 = arith.constant 0 : i32
    %c0_i32_0 = arith.constant 0 : i32
    return %c0_i32, %arg0 : i32, i32
  }
  func.func @transform_3(%arg0: i32) -> (i32, i32) {
    %c0_i32 = arith.constant 0 : i32
    %c0_i32_0 = arith.constant 0 : i32
    return %c0_i32, %arg0 : i32, i32
  }
}

</mosaic_0001>

<llo_original>
// kernel: tpu_custom_call.1
$region0: #{tpu_custom_call.1}
  #allocation0 [shape = 'u32[]', space=smem, size = 0x4, offset = 0x4, fixed_abs, tag = 'smem constant byte address 0x4 - core index']
  #allocation1 [shape = 'u32[72,128]{1,0:T(1,128)}', space=vmem, size = 0x9000, scoped, tag = 'internal scratch']
  %s0 = inlined_call_operand.hbm [shape: f32[2], index: 0, kind: input, shape index: {}]
  %s1 = inlined_call_operand.hbm [shape: f32[8,32], index: 1, kind: input, shape index: {}]
  %s2 = inlined_call_operand.vmem [shape: f32[1,32], index: 2, kind: input, shape index: {}]
  %s3 = inlined_call_operand.hbm [shape: f32[8,32], index: 3, kind: output, shape index: {}]
  %s4 = sld [smem:[#allocation0]]
  $region30: #{tpu_custom_call.1} parent=0
    _
  %s6 = ssub.s32 1, %s4
  %s7 = scalar_select 0, %s6, %s4
  $region1: #{tpu_custom_call.1} parent=0
    #allocation2 [shape = 'u8[512]{0}', space=smem, size = 0x200, scoped, tag = 'input window, operand 0, single buffered']
    #allocation3 [shape = 's32[1]{0}', space=sflag, size = 0x4, scoped, tag = 'scoped memory for tpu_custom_call.1']
    #allocation4 [shape = 's32[1]{0}', space=sflag, size = 0x4, scoped, tag = 'scoped memory for tpu_custom_call.1']
    #allocation5 [shape = 's32[1]{0}', space=sflag, size = 0x4, scoped, tag = 'scoped memory for tpu_custom_call.1']
    #allocation6 [shape = 'u8[4096]{0}', space=vmem, size = 0x1000, scoped, tag = 'input window, operand 1, single buffered']
    #allocation7 [shape = 'u8[4096]{0}', space=vmem, size = 0x1000, scoped, tag = 'output window, operand 0, single buffered']
    %8 = vsyncpa [#allocation5], 0
    %9 = vsyncpa [#allocation3], 0
    %10 = vsyncpa [#allocation4], 0
    // Predicated region
    $region2: #{tpu_custom_call.1} parent=1 // pred_check
      _
    $region3: #{tpu_custom_call.1} parent=1 // pred_check_branch
      %12 = sbr.rel (0) target = $region5
    $region4: #{tpu_custom_call.1} parent=1 // pred_region
      %14 = vsyncadd [#allocation5], 0
      %s16 = sshll.u32 %s0, 4
      %s17 = int_to_ptr.hbm [resolvable:$true] %s16
      %19 = dma.hbm_to_smem %s17, 16, [#allocation2], [#allocation5]
    $region5: #{tpu_custom_call.1} parent=1 // pred_fallthru
      _
    // Predicated region
    $region6: #{tpu_custom_call.1} parent=1 // pred_check
      _
    $region7: #{tpu_custom_call.1} parent=1 // pred_check_branch
      %21 = sbr.rel (0) target = $region9
    $region8: #{tpu_custom_call.1} parent=1 // pred_region
      %23 = vsyncadd [#allocation3], 0
      %s25 = sshll.u32 %s1, 4
      %s26 = int_to_ptr.hbm [resolvable:$true] %s25
      %s27 = sshll.u32 [#allocation6], 4
      %s28 = int_to_ptr.vmem [resolvable:$true] %s27
      %30 = dma.hbm_to_vmem [thread:$0]  %s26, 128, %s28, [#allocation3]
    $region9: #{tpu_custom_call.1} parent=1 // pred_fallthru
      _
    // Predicated region
    $region10: #{tpu_custom_call.1} parent=1 // pred_check
      _
    $region11: #{tpu_custom_call.1} parent=1 // pred_check_branch
      %32 = sbr.rel (0) target = $region13
    $region12: #{tpu_custom_call.1} parent=1 // pred_region
      _
    $region13: #{tpu_custom_call.1} parent=1 // pred_fallthru
      _
    // Predicated region
    $region14: #{tpu_custom_call.1} parent=1 // pred_check
      _
    $region15: #{tpu_custom_call.1} parent=1 // pred_check_branch
      %34 = sbr.rel (0) target = $region17
    $region16: #{tpu_custom_call.1} parent=1 // pred_region
      %36 = dma.done [#allocation5], 16
    $region17: #{tpu_custom_call.1} parent=1 // pred_fallthru
      _
    // Predicated region
    $region18: #{tpu_custom_call.1} parent=1 // pred_check
      _
    $region19: #{tpu_custom_call.1} parent=1 // pred_check_branch
      %38 = sbr.rel (0) target = $region21
    $region20: #{tpu_custom_call.1} parent=1 // pred_region
      %40 = dma.done [#allocation3], 128
    $region21: #{tpu_custom_call.1} parent=1 // pred_fallthru
      _
    %41 = sfence
    %s42 = sld [smem:[#allocation2]]
    %s43 = sld [smem:[#allocation2 + $0x1]]
    %v44 = vld [vmem:[#allocation6] sm:$0xff]
    %vm45 = vcmask 261120
    %v46 = vsel %vm45, %v44, 0.0
    %v47 = vrot.slane %v46, 4
    %v48 = vadd.f32 %v46, %v47
    %v49 = vrot.slane %v48, 2
    %v50 = vadd.f32 %v48, %v49
    %v51 = vrot.slane %v50, 1
    %v52 = vadd.f32 %v50, %v51
    %v53 = vmul.f32 %v44, %v44
    %v54 = vsel %vm45, %v53, 0.0
    %v55 = vrot.slane %v54, 4
    %v56 = vadd.f32 %v54, %v55
    %v57 = vrot.slane %v56, 2
    %v58 = vadd.f32 %v56, %v57
    %v59 = vrot.slane %v58, 1
    %v60 = vadd.f32 %v58, %v59
    %v61 = vmul.f32 %v52, 0.125
    %v62 = vmul.f32 %v52, %v61
    %v63 = vsub.f32 %v60, %v62
    %v64 = vmul.f32 %v63, 0.14285715
    %v65 = vmax.f32 %v64, 0.0
    %v66 = vstv %s42
    %v67 = vadd.f32 %v65, %v66
    %v68 = vrsqrt.pop %v67
    %v69 = vmul.f32 %v68, %v67
    %v70 = vmul.f32 %v69, %v68
    %v71 = vmul.f32 0.5, %v70
    %v72 = vsub.f32 1.5, %v71
    %v73 = vmul.f32 %v68, %v72
    %vm74 = vweird.f32 %v67
    %vm75 = vweird.f32 %v68
    %vm76 = vmor %vm74, %vm75
    %v77 = vsel %vm76, %v68, %v73
    %v78 = vld [vmem:[%s2] sm:$0x1]
    %v79 = vmul.f32 %v78, %v77
    %v80 = vmul.f32 %v61, %v79
    %v81 = vstv %s43
    %v82 = vsub.f32 %v81, %v80
    %v84 = vperm.slane %v79, 0
    %v86 = vmul.f32 %v44, %v84
    %v87 = vperm.slane %v82, 0
    %v88 = vadd.f32 %v86, %v87
    %89 = vst.msk [vmem:[#allocation7] sm:$0xff] %vm45, %v88
    // Predicated region
    $region22: #{tpu_custom_call.1} parent=1 // pred_check
      _
    $region23: #{tpu_custom_call.1} parent=1 // pred_check_branch
      %91 = sbr.rel (0) target = $region25
    $region24: #{tpu_custom_call.1} parent=1 // pred_region
      %93 = vsyncadd [#allocation4], 0
      %s95 = sshll.u32 [#allocation7], 4
      %s96 = int_to_ptr.vmem [resolvable:$true] %s95
      %s97 = sshll.u32 %s3, 4
      %s98 = int_to_ptr.hbm [resolvable:$true] %s97
      %100 = dma.vmem_to_hbm [thread:$0]  %s96, 128, %s98, [#allocation4]
    $region25: #{tpu_custom_call.1} parent=1 // pred_fallthru
      _
    // Predicated region
    $region26: #{tpu_custom_call.1} parent=1 // pred_check
      _
    $region27: #{tpu_custom_call.1} parent=1 // pred_check_branch
      %102 = sbr.rel (0) target = $region29
    $region28: #{tpu_custom_call.1} parent=1 // pred_region
      %104 = dma.done [#allocation4], 128
    $region29: #{tpu_custom_call.1} parent=1 // pred_fallthru
      _
    %105 = vsyncpa [#allocation3], 1
    %106 = vsyncpa [#allocation4], 1
    %107 = vsyncpa [#allocation5], 1

</llo_original>
